<compile_context>
chip_gen: v7x
topology: tpu7x:2x2x1
jax: 0.10.0
libtpu: 0.0.40
codegen_flags: <defaults>
</compile_context>

<pallas_src>
import functools

import jax
import jax.numpy as jnp
from jax import lax
from jax.experimental import pallas as pl
from jax.experimental.pallas import tpu as pltpu

L2_REG = 0.05          # self.L2_reg in the PyTorch module
_PAD_Y = -1e30         # padded "key" samples are excluded from every real risk set


def _round_up(x, m):
    return ((x + m - 1) // m) * m


def _nll_kernel(y_q_ref, y_k_ref, er_k_ref, loss1_ref, *, key_chunk):
    """One query tile of the Cox risk-set reduction.

    y_q_ref   : (1, TQ)   y of the query tile (query index on lanes)
    y_k_ref   : (NK, 1)   ALL key y values, VMEM-resident
    er_k_ref  : (NK, 1)   ALL key exp(risk - max_risk) values, VMEM-resident
    loss1_ref : (1, TQ)   lane-dense output: log(num/den) per query
    The key sweep is an in-kernel fori_loop over `key_chunk`-row chunks, so the
    per-grid-step overhead is paid only once per query tile.
    """
    tq = y_q_ref.shape[1]
    n_chunks = y_k_ref.shape[0] // key_chunk

    y_q = y_q_ref[...]                                    # (1, TQ)

    def body(c, carry):
        num, den = carry                                  # (1, TQ) each
        base = pl.multiple_of(c * key_chunk, 8)
        y_k = y_k_ref[pl.ds(base, key_chunk), :]          # (CK, 1)
        er_k = er_k_ref[pl.ds(base, key_chunk), :]        # (CK, 1)
        # inc[b, a] = 1 iff key b is in the risk set of query a  (y_b >= y_a)
        inc = (y_k >= y_q).astype(jnp.float32)            # (CK, TQ)
        num = num + jnp.sum(inc * er_k, axis=0, keepdims=True)
        den = den + jnp.sum(inc, axis=0, keepdims=True)
        return num, den

    num0 = jnp.zeros((1, tq), jnp.float32)
    den0 = jnp.zeros((1, tq), jnp.float32)
    num, den = lax.fori_loop(0, n_chunks, body, (num0, den0))

    loss1_ref[...] = jnp.log(num / den)                   # lane-dense store


def _key_chunking(n):
    """Pick the in-kernel key chunk (multiple of 8, ~256) and the padded key length."""
    n8 = _round_up(max(n, 1), 8)
    n_chunks = max(1, (n8 + 255) // 256)          # target ~256 keys per chunk
    ck = _round_up((n8 + n_chunks - 1) // n_chunks, 8)
    return ck, ck * n_chunks


def _query_tiling(n):
    """Pad queries at 128 granularity; prefer >=2 tiles so both v7x TCs get work."""
    nq = _round_up(max(n, 1), 128)
    for t in (512, 256):
        if nq % t == 0 and nq // t >= 2:
            return nq, t
    return nq, 128


def _cox_loss1(risk_pred, y):
    """loss_1[j] = log( sum_i e^{r_i}[y_i>=y_j] / sum_i [y_i>=y_j] ), shape (N, 1)."""
    n = risk_pred.shape[0]

    y_f = y.astype(jnp.float32).reshape(-1)
    r_f = risk_pred.astype(jnp.float32).reshape(-1)

    # Exact stabilization: work with exp(r - m) and add m back after the log.
    m = jnp.max(r_f)
    er_f = jnp.exp(r_f - m)

    # Query side: lane-dense row, padded at 128 granularity.
    nq, tq = _query_tiling(n)
    y_row = jnp.pad(y_f, (0, nq - n), constant_values=_PAD_Y).reshape(1, nq)

    # Key side: VMEM-resident columns, padded only to the chunk size.
    ck, nk = _key_chunking(n)
    y_col = jnp.pad(y_f, (0, nk - n), constant_values=_PAD_Y).reshape(nk, 1)
    er_col = jnp.pad(er_f, (0, nk - n)).reshape(nk, 1)    # padded keys contribute 0

    grid = (nq // tq,)    # 1-D query grid; the key sweep is the in-kernel loop

    loss1_row = pl.pallas_call(
        functools.partial(_nll_kernel, key_chunk=ck),
        out_shape=jax.ShapeDtypeStruct((1, nq), jnp.float32),
        grid=grid,
        in_specs=[
            pl.BlockSpec((1, tq), lambda i: (0, i)),   # y of the query tile
            pl.BlockSpec((nk, 1), lambda i: (0, 0)),   # all key y (resident)
            pl.BlockSpec((nk, 1), lambda i: (0, 0)),   # all key exp(risk - m) (resident)
        ],
        out_specs=pl.BlockSpec((1, tq), lambda i: (0, i)),
        compiler_params=pltpu.CompilerParams(
            dimension_semantics=("parallel",),         # megacore split of query tiles
            vmem_limit_bytes=48 << 20),                # fits v7x 64 MiB; >> actual need
    )(y_row, y_col, er_col)

    return (loss1_row[0, :n] + m).reshape(n, 1)


def negative_log_likelihood(risk_pred, y, e, model_weights):
    """Forward pass of NegativeLogLikelihood.

    risk_pred, y, e : (N, 1) float32.
    model_weights   : list of 'weight' parameter arrays (L2-regularized).
    Returns a shape-(1,) float32 loss.
    """
    n = risk_pred.shape[0]
    risk_f = risk_pred.astype(jnp.float32).reshape(n, 1)
    y_f = y.astype(jnp.float32).reshape(n, 1)
    e_f = e.astype(jnp.float32).reshape(n, 1)

    loss_1 = _cox_loss1(risk_f, y_f)                       # (N, 1), Pallas (O(N^2))

    # O(N) event-weighted terms stay out of the N^2 kernel (fused by XLA).
    num_occurs = jnp.sum(e_f)
    safe_occurs = jnp.where(num_occurs == 0.0, 1.0, num_occurs)  # avoid NaN propagation
    neg_log_loss = -jnp.sum((risk_f - loss_1) * e_f) / safe_occurs

    # Frobenius norms of 'weight' params: tiny reductions — plain jnp (fused by XLA).
    reg = jnp.float32(0.0)
    for w in model_weights:
        w32 = w.astype(jnp.float32)
        reg = reg + jnp.sqrt(jnp.sum(w32 * w32))
    l2_loss = L2_REG * reg

    # PyTorch branches host-side on num_occurs.item() == 0.0; we select instead.
    loss = jnp.where(num_occurs == 0.0, jnp.float32(1e-7), neg_log_loss + l2_loss)
    return loss.reshape(1)


def _reference(risk_pred, y, e, model_weights):
    """Pure-JAX port of the PyTorch forward, for verification."""
    mask = jnp.where((y.T - y) > 0.0, 0.0, 1.0)
    loss_1 = jnp.exp(risk_pred) * mask
    loss_1 = jnp.sum(loss_1, axis=0) / jnp.sum(mask, axis=0)
    loss_1 = jnp.log(loss_1).reshape(-1, 1)
    num_occurs = jnp.sum(e)
    neg_log_loss = -jnp.sum((risk_pred - loss_1) * e) / num_occurs
    l2 = L2_REG * sum(jnp.sqrt(jnp.sum(w * w)) for w in model_weights)
    return jnp.where(num_occurs == 0.0, jnp.float32(1e-7), neg_log_loss + l2)


if __name__ == "__main__":
    FEAT = 8       # input features of the synthetic model
    HIDDEN = 32    # hidden width of the synthetic model

    loss_fn = jax.jit(negative_log_likelihood)

    # Deterministic synthetic "model" weights (only 'weight' params are regularized).
    kw = jax.random.PRNGKey(0)
    k_w1, k_w2 = jax.random.split(kw)
    w1 = jax.random.normal(k_w1, (HIDDEN, FEAT), dtype=jnp.float32) * 0.1
    w2 = jax.random.normal(k_w2, (1, HIDDEN), dtype=jnp.float32) * 0.1
    weights = [w1, w2]

    # Two batch sizes: a tiny one and one that exercises multiple query tiles and
    # multiple in-kernel key chunks (plus non-trivial padding on both axes).
    for N in (8, 300):
        key = jax.random.PRNGKey(0)
        k_risk, k_y, k_e = jax.random.split(key, 3)
        risk_pred = jax.random.normal(k_risk, (N, 1), dtype=jnp.float32)
        y = jax.random.uniform(k_y, (N, 1), dtype=jnp.float32) * 10.0    # survival times
        e = (jax.random.uniform(k_e, (N, 1)) > 0.3).astype(jnp.float32)  # event flags

        loss = jax.block_until_ready(loss_fn(risk_pred, y, e, weights))
        ref = _reference(risk_pred, y, e, weights)
        # f32 summation order differs (chunked + stabilized) from the monolithic
        # reference reduce, so allow a few ulps of slack on the ~O(1) loss value.
        assert jnp.allclose(loss[0], ref, rtol=5e-5, atol=1e-5), (N, loss, ref)

    print("KERNEL_OK")
</pallas_src>

<mosaic_0001>
module attributes {stable_mosaic.version = 11 : i64} {
  func.func @_nll_kernel(%arg0: i32, %arg1: memref<1x128xf32, #tpu.memory_space<vmem>>, %arg2: memref<8x1xf32, #tpu.memory_space<vmem>>, %arg3: memref<8x1xf32, #tpu.memory_space<vmem>>, %arg4: memref<1x128xf32, #tpu.memory_space<vmem>>) attributes {dimension_semantics = [#tpu.dimension_semantics<parallel>], iteration_bounds = array<i64: 1>, scalar_prefetch = 0 : i64, scratch_operands = 0 : i64, tpu.core_type = #tpu.core_type<tc>, window_params = [{transform_indices = @transform_0, window_bounds = array<i64: 1, 128>}, {pipeline_mode = #tpu.pipeline_mode<synchronous>, transform_indices = @transform_1, window_bounds = array<i64: 8, 1>}, {pipeline_mode = #tpu.pipeline_mode<synchronous>, transform_indices = @transform_2, window_bounds = array<i64: 8, 1>}, {transform_indices = @transform_3, window_bounds = array<i64: 1, 128>}]} {
    %c0 = arith.constant 0 : index
    %c0_0 = arith.constant 0 : index
    %0 = vector.load %arg1[%c0, %c0_0] : memref<1x128xf32, #tpu.memory_space<vmem>>, vector<1x128xf32>
    %cst = arith.constant 0.000000e+00 : f32
    %1 = vector.broadcast %cst : f32 to vector<1x128xf32>
    %cst_1 = arith.constant 0.000000e+00 : f32
    %2 = vector.broadcast %cst_1 : f32 to vector<1x128xf32>
    %c0_i32 = arith.constant 0 : i32
    %c8_i32 = arith.constant 8 : i32
    %3 = arith.muli %c0_i32, %c8_i32 : i32
    %4 = tpu.assume_multiple %3, 8 : i32
    %5 = arith.index_cast %4 : i32 to index
    %c0_2 = arith.constant 0 : index
    %6 = vector.load %arg2[%5, %c0_2] : memref<8x1xf32, #tpu.memory_space<vmem>>, vector<8x1xf32>
    %7 = arith.index_cast %4 : i32 to index
    %c0_3 = arith.constant 0 : index
    %8 = vector.load %arg3[%7, %c0_3] : memref<8x1xf32, #tpu.memory_space<vmem>>, vector<8x1xf32>
    %9 = vector.broadcast %6 : vector<8x1xf32> to vector<8x128xf32>
    %10 = vector.broadcast %0 : vector<1x128xf32> to vector<8x128xf32>
    %11 = arith.cmpf oge, %9, %10 : vector<8x128xf32>
    %12 = arith.extui %11 : vector<8x128xi1> to vector<8x128xi32>
    %13 = arith.sitofp %12 : vector<8x128xi32> to vector<8x128xf32>
    %14 = vector.broadcast %8 : vector<8x1xf32> to vector<8x128xf32>
    %15 = arith.mulf %13, %14 : vector<8x128xf32>
    %cst_4 = arith.constant dense<0.000000e+00> : vector<128xf32>
    %16 = vector.multi_reduction <add>, %15, %cst_4 [0] : vector<8x128xf32> to vector<128xf32>
    %17 = vector.shape_cast %16 : vector<128xf32> to vector<1x128xf32>
    %18 = arith.addf %1, %17 : vector<1x128xf32>
    %cst_5 = arith.constant dense<0.000000e+00> : vector<128xf32>
    %19 = vector.multi_reduction <add>, %13, %cst_5 [0] : vector<8x128xf32> to vector<128xf32>
    %20 = vector.shape_cast %19 : vector<128xf32> to vector<1x128xf32>
    %21 = arith.addf %2, %20 : vector<1x128xf32>
    %c1_i32 = arith.constant 1 : i32
    %22 = arith.divf %18, %21 : vector<1x128xf32>
    %23 = math.log %22 : vector<1x128xf32>
    %c0_6 = arith.constant 0 : index
    %c0_7 = arith.constant 0 : index
    %24 = vector.load %arg4[%c0_6, %c0_7] : memref<1x128xf32, #tpu.memory_space<vmem>>, vector<1x128xf32>
    tpu.vector_store %arg4[%c0_6, %c0_7], %23 {strides = array<i32>} : memref<1x128xf32, #tpu.memory_space<vmem>>, vector<1x128xf32>,
    return
  }
  func.func @transform_0(%arg0: i32) -> (i32, i32) {
    %c0_i32 = arith.constant 0 : i32
    %c0_i32_0 = arith.constant 0 : i32
    return %c0_i32, %arg0 : i32, i32
  }
  func.func @transform_1(%arg0: i32) -> (i32, i32) {
    %c0_i32 = arith.constant 0 : i32
    %c0_i32_0 = arith.constant 0 : i32
    %c0_i32_1 = arith.constant 0 : i32
    return %c0_i32, %c0_i32_0 : i32, i32
  }
  func.func @transform_2(%arg0: i32) -> (i32, i32) {
    %c0_i32 = arith.constant 0 : i32
    %c0_i32_0 = arith.constant 0 : i32
    %c0_i32_1 = arith.constant 0 : i32
    return %c0_i32, %c0_i32_0 : i32, i32
  }
  func.func @transform_3(%arg0: i32) -> (i32, i32) {
    %c0_i32 = arith.constant 0 : i32
    %c0_i32_0 = arith.constant 0 : i32
    return %c0_i32, %arg0 : i32, i32
  }
}

</mosaic_0001>

<llo_original>
// kernel: negative_log_likelihood.1
$region0: #{negative_log_likelihood.1}
  #allocation0 [shape = 'u32[]', space=smem, size = 0x4, offset = 0x4, fixed_abs, tag = 'smem constant byte address 0x4 - core index']
  #allocation1 [shape = 'u32[144,128]{1,0:T(1,128)}', space=vmem, size = 0x12000, scoped, tag = 'internal scratch']
  %s0 = inlined_call_operand.vmem [shape: f32[1,128], index: 0, kind: input, shape index: {}]
  %s1 = inlined_call_operand.vmem [shape: f32[8,1], index: 1, kind: input, shape index: {}]
  %s2 = inlined_call_operand.vmem [shape: f32[8,1], index: 2, kind: input, shape index: {}]
  %s3 = inlined_call_operand.vmem [shape: f32[1,128], index: 3, kind: output, shape index: {}]
  %s4 = sld [smem:[#allocation0]]
  $region22: #{negative_log_likelihood.1} parent=0
    _
  %s6 = ssub.s32 1, %s4
  %s7 = scalar_select 0, %s6, %s4
  // Predicated region
  $region2: #{negative_log_likelihood.1} parent=0 // pred_check
    _
  $region3: #{negative_log_likelihood.1} parent=0 // pred_check_branch
    %9 = sbr.rel (0) target = $region5
  $region4: #{negative_log_likelihood.1} parent=0 // pred_region
    _
  $region5: #{negative_log_likelihood.1} parent=0 // pred_fallthru
    _
  // Predicated region
  $region6: #{negative_log_likelihood.1} parent=0 // pred_check
    _
  $region7: #{negative_log_likelihood.1} parent=0 // pred_check_branch
    %11 = sbr.rel (0) target = $region9
  $region8: #{negative_log_likelihood.1} parent=0 // pred_region
    _
  $region9: #{negative_log_likelihood.1} parent=0 // pred_fallthru
    _
  // Predicated region
  $region10: #{negative_log_likelihood.1} parent=0 // pred_check
    _
  $region11: #{negative_log_likelihood.1} parent=0 // pred_check_branch
    %13 = sbr.rel (0) target = $region13
  $region12: #{negative_log_likelihood.1} parent=0 // pred_region
    _
  $region13: #{negative_log_likelihood.1} parent=0 // pred_fallthru
    _
  %v14 = vld [vmem:[%s0] sm:$0x1]
  %v15 = vld [vmem:[%s1] sm:$0xff]
  %v16 = vld [vmem:[%s2] sm:$0xff]
  %18 = vset.pattern.permute.xlu0 0
  %19 = vperm.xlu0 %18, %v15
  %v20 = vpop.permute.xlu0 %19
  %v23 = vlaneseq
  %v24 = vshrl.u32 %v23, 7
  %v25 = vsub.s32 0, %v24
  %v26 = vrot.slane %v14, %v25
  %vm28 = vcmp.ge.f32.partialorder %v20, %v26
  %v29 = vsel %vm28, 1, 0
  %v30 = vcvt.s32.f32 %v29
  %32 = vset.pattern.permute.xlu0 0
  %33 = vperm.xlu0 %32, %v16
  %v34 = vpop.permute.xlu0 %33
  %v36 = vmul.f32 %v30, %v34
  %v37 = vrot.slane %v36, 4
  %v38 = vadd.f32 %v36, %v37
  %v39 = vrot.slane %v38, 2
  %v40 = vadd.f32 %v38, %v39
  %v41 = vrot.slane %v40, 1
  %v42 = vadd.f32 %v40, %v41
  %v43 = vadd.f32 %v42, 0.0
  %v44 = vrot.slane %v30, 4
  %v45 = vadd.f32 %v30, %v44
  %v46 = vrot.slane %v45, 2
  %v47 = vadd.f32 %v45, %v46
  %v48 = vrot.slane %v47, 1
  %v49 = vadd.f32 %v47, %v48
  %v50 = vadd.f32 %v49, 0.0
  %v51 = vrcp.pop %v50
  %v52 = vmul.f32 %v43, %v51
  %v53 = vlog2.pop %v52
  %v54 = vmul.f32 %v53, 0.6931472
  %55 = vst [vmem:[%s3] sm:$0x1] %v54
  // Predicated region
  $region14: #{negative_log_likelihood.1} parent=0 // pred_check
    _
  $region15: #{negative_log_likelihood.1} parent=0 // pred_check_branch
    %57 = sbr.rel (0) target = $region17
  $region16: #{negative_log_likelihood.1} parent=0 // pred_region
    _
  $region17: #{negative_log_likelihood.1} parent=0 // pred_fallthru
    _
  // Predicated region
  $region18: #{negative_log_likelihood.1} parent=0 // pred_check
    _
  $region19: #{negative_log_likelihood.1} parent=0 // pred_check_branch
    %59 = sbr.rel (0) target = $region21
  $region20: #{negative_log_likelihood.1} parent=0 // pred_region
    _
  $region21: #{negative_log_likelihood.1} parent=0 // pred_fallthru
    _

</llo_original>
